<compile_context>
chip_gen: v7x
topology: tpu7x:2x2x1
jax: 0.10.0
libtpu: 0.0.40
codegen_flags: <defaults>
</compile_context>

<pallas_src>
import jax
import jax.numpy as jnp
from jax import lax
from jax.experimental import pallas as pl
from jax.experimental.pallas import tpu as pltpu
import numpy as np


def _bwf_kernel(xs_ref, w_ref, b_ref, o_ref):
    # xs_ref : (2, H+2, L+2) stacked x1/x2; 1 zero guard row (H halo) and 1 zero
    #          guard lane on each side so shifted reads stay in-bounds.
    # w_ref  : (2, 9, L)     per-lane 3x3 taps (BN scale folded in; taps that
    #                        would read across a channel block are pre-zeroed).
    # b_ref  : (1, L)        per-lane bias (conv bias + BN folded).
    # o_ref  : (Hb, L)       lane-dense output row-block for this grid step.
    Hb, L = o_ref.shape
    i = pl.program_id(0)
    r0 = pl.multiple_of(i * Hb, Hb)

    accs = []
    for s in range(2):                                   # s=0 -> x1 taps, s=1 -> x2 taps
        x = xs_ref[s, pl.ds(r0, Hb + 2), :]              # (Hb+2, L+2) rows incl. halo
        w_s = w_ref[s]                                   # (9, L), loaded once
        acc = jnp.zeros((Hb, L), jnp.float32)
        for kw in range(3):                              # lane (W) offset = kw - 1
            xw = x[:, kw:kw + L]                         # (Hb+2, L)
            for kh in range(3):                          # sublane (H) offset = kh - 1
                k = kh * 3 + kw
                acc = acc + w_s[k:k + 1, :] * xw[kh:kh + Hb, :]
        accs.append(acc)

    z = accs[0] + accs[1] + b_ref[...]
    # exact (erf-based) GELU == nn.GELU() default; Dropout(0.2) -> identity (eval).
    out = z * 0.5 * (1.0 + lax.erf(z * 0.7071067811865476))
    o_ref[...] = out.astype(o_ref.dtype)


def band_wise_fusion(x1, x2, params):
    B, C, H, W = x1.shape
    L = B * C * W                                        # lane width (128 for demo shapes)

    w = params["conv_w"]                                 # (C, 2, 3, 3) = (out, in/groups, kh, kw)
    b = params["conv_b"]                                 # (C,)
    gamma, beta = params["bn_gamma"], params["bn_beta"]
    mean, var = params["bn_mean"], params["bn_var"]
    eps = 1e-5

    # Fold eval-mode BatchNorm into the conv weights / bias.
    s_bn = gamma / jnp.sqrt(var + eps)                   # (C,)
    w_eff = (w * s_bn[:, None, None, None]).astype(jnp.float32)   # (C, 2, 3, 3)
    bias_eff = (b * s_bn + (beta - mean * s_bn)).astype(jnp.float32)  # (C,)

    # Per-lane tap / bias vectors; lane l encodes (b, c, w) = ((l//W)//C, (l//W)%C, l%W).
    lane = jnp.arange(L)
    c_lane = (lane // W) % C
    w_pos = lane % W
    taps = w_eff[c_lane].transpose(1, 2, 3, 0).reshape(2, 9, L)   # (2, 9, L)
    kw_idx = (jnp.arange(9) % 3)[None, :, None]                   # (1, 9, 1)
    wl = w_pos[None, None, :]                                     # (1, 1, L)
    # Zero taps that would read across a channel block boundary (conv zero-pad in W).
    edge_ok = ((kw_idx != 0) | (wl != 0)) & ((kw_idx != 2) | (wl != W - 1))
    taps = taps * edge_ok.astype(taps.dtype)
    bias_lane = bias_eff[c_lane][None, :]                         # (1, L)

    # Lane-dense packing of activations: (B,C,H,W) -> (H, B*C*W), stack x1/x2,
    # add 1 guard row (top/bottom) and 1 guard lane (left/right).
    def pack(x):
        return x.transpose(2, 0, 1, 3).reshape(H, L)
    xs = jnp.stack([pack(x1), pack(x2)]).astype(jnp.float32)      # (2, H, L)
    xs = jnp.pad(xs, ((0, 0), (1, 1), (1, 1)))                    # (2, H+2, L+2)

    # Two parallel row-blocks when possible (v7x megacore); blocks stay (8k, L).
    n_split = 2 if H % 16 == 0 else 1
    Hb = H // n_split

    out_lane = pl.pallas_call(
        _bwf_kernel,
        out_shape=jax.ShapeDtypeStruct((H, L), x1.dtype),
        grid=(n_split,),
        in_specs=[
            pl.BlockSpec((2, H + 2, L + 2), lambda i: (0, 0, 0)),
            pl.BlockSpec((2, 9, L), lambda i: (0, 0, 0)),
            pl.BlockSpec((1, L), lambda i: (0, 0)),
        ],
        out_specs=pl.BlockSpec((Hb, L), lambda i: (i, 0)),
        compiler_params=pltpu.CompilerParams(
            dimension_semantics=("parallel",)),
    )(xs, taps, bias_lane)

    # (H, B*C*W) -> (B, C, H, W)
    return out_lane.reshape(H, B, C, W).transpose(1, 2, 0, 3)


def reference(x1, x2, params):
    """Plain-JAX replica of the PyTorch forward (eval mode)."""
    B, C, H, W = x1.shape
    x = jnp.zeros((B, 2 * C, H, W), x1.dtype)
    x = x.at[:, 0::2].set(x1).at[:, 1::2].set(x2)
    y = lax.conv_general_dilated(
        x, params["conv_w"], window_strides=(1, 1), padding=((1, 1), (1, 1)),
        dimension_numbers=("NCHW", "OIHW", "NCHW"), feature_group_count=C)
    y = y + params["conv_b"][None, :, None, None]
    eps = 1e-5
    y = (y - params["bn_mean"][None, :, None, None]) * (
        params["bn_gamma"] / jnp.sqrt(params["bn_var"] + eps))[None, :, None, None]
    y = y + params["bn_beta"][None, :, None, None]
    return jax.nn.gelu(y, approximate=False)


if __name__ == "__main__":
    # in_planes = 8 => out_planes = 4; x1, x2 each have 4 channels.
    B, C, H, W = 2, 4, 16, 16          # B*C*W = 128 -> fully lane-dense
    key = jax.random.PRNGKey(0)
    k1, k2, k3, k4, k5, k6 = jax.random.split(key, 6)
    x1 = jax.random.normal(k1, (B, C, H, W), jnp.float32)
    x2 = jax.random.normal(k2, (B, C, H, W), jnp.float32)
    params = dict(
        conv_w=0.1 * jax.random.normal(k3, (C, 2, 3, 3), jnp.float32),
        conv_b=0.05 * jax.random.normal(k4, (C,), jnp.float32),
        bn_gamma=1.0 + 0.1 * jax.random.normal(k5, (C,), jnp.float32),
        bn_beta=0.1 * jax.random.normal(k6, (C,), jnp.float32),
        bn_mean=jnp.zeros((C,), jnp.float32),   # PyTorch default running stats
        bn_var=jnp.ones((C,), jnp.float32),
    )

    out = jax.block_until_ready(band_wise_fusion(x1, x2, params))
    ref = reference(x1, x2, params)
    np.testing.assert_allclose(np.asarray(out), np.asarray(ref),
                               rtol=1e-4, atol=1e-4)
    print("KERNEL_OK")
</pallas_src>

<mosaic_0001>
module attributes {stable_mosaic.version = 11 : i64} {
  func.func @_bwf_kernel(%arg0: i32, %arg1: memref<2x18x130xf32, #tpu.memory_space<vmem>>, %arg2: memref<2x9x128xf32, #tpu.memory_space<vmem>>, %arg3: memref<1x128xf32, #tpu.memory_space<vmem>>, %arg4: memref<8x128xf32, #tpu.memory_space<vmem>>) attributes {dimension_semantics = [#tpu.dimension_semantics<parallel>], iteration_bounds = array<i64: 2>, scalar_prefetch = 0 : i64, scratch_operands = 0 : i64, tpu.core_type = #tpu.core_type<tc>, window_params = [{pipeline_mode = #tpu.pipeline_mode<synchronous>, transform_indices = @transform_0, window_bounds = array<i64: 2, 18, 130>}, {pipeline_mode = #tpu.pipeline_mode<synchronous>, transform_indices = @transform_1, window_bounds = array<i64: 2, 9, 128>}, {pipeline_mode = #tpu.pipeline_mode<synchronous>, transform_indices = @transform_2, window_bounds = array<i64: 1, 128>}, {transform_indices = @transform_3, window_bounds = array<i64: 8, 128>}]} {
    %c8_i32 = arith.constant 8 : i32
    %0 = arith.muli %arg0, %c8_i32 : i32
    %1 = tpu.assume_multiple %0, 8 : i32
    %c0 = arith.constant 0 : index
    %2 = arith.index_cast %1 : i32 to index
    %c0_0 = arith.constant 0 : index
    %3 = vector.load %arg1[%c0, %2, %c0_0] : memref<2x18x130xf32, #tpu.memory_space<vmem>>, vector<1x10x130xf32>
    %4 = vector.shape_cast %3 : vector<1x10x130xf32> to vector<10x130xf32>
    %c0_1 = arith.constant 0 : index
    %c0_2 = arith.constant 0 : index
    %c0_3 = arith.constant 0 : index
    %5 = vector.load %arg2[%c0_1, %c0_2, %c0_3] : memref<2x9x128xf32, #tpu.memory_space<vmem>>, vector<1x9x128xf32>
    %6 = vector.shape_cast %5 : vector<1x9x128xf32> to vector<9x128xf32>
    %cst = arith.constant 0.000000e+00 : f32
    %7 = vector.broadcast %cst : f32 to vector<8x128xf32>
    %8 = vector.extract_strided_slice %4 {offsets = [0, 0], sizes = [10, 128], strides = [1, 1]} : vector<10x130xf32> to vector<10x128xf32>
    %9 = vector.extract_strided_slice %6 {offsets = [0, 0], sizes = [1, 128], strides = [1, 1]} : vector<9x128xf32> to vector<1x128xf32>
    %10 = vector.extract_strided_slice %8 {offsets = [0, 0], sizes = [8, 128], strides = [1, 1]} : vector<10x128xf32> to vector<8x128xf32>
    %11 = vector.broadcast %9 : vector<1x128xf32> to vector<8x128xf32>
    %12 = arith.mulf %11, %10 : vector<8x128xf32>
    %13 = arith.addf %7, %12 : vector<8x128xf32>
    %14 = vector.extract_strided_slice %6 {offsets = [3, 0], sizes = [1, 128], strides = [1, 1]} : vector<9x128xf32> to vector<1x128xf32>
    %15 = vector.extract_strided_slice %8 {offsets = [1, 0], sizes = [8, 128], strides = [1, 1]} : vector<10x128xf32> to vector<8x128xf32>
    %16 = vector.broadcast %14 : vector<1x128xf32> to vector<8x128xf32>
    %17 = arith.mulf %16, %15 : vector<8x128xf32>
    %18 = arith.addf %13, %17 : vector<8x128xf32>
    %19 = vector.extract_strided_slice %6 {offsets = [6, 0], sizes = [1, 128], strides = [1, 1]} : vector<9x128xf32> to vector<1x128xf32>
    %20 = vector.extract_strided_slice %8 {offsets = [2, 0], sizes = [8, 128], strides = [1, 1]} : vector<10x128xf32> to vector<8x128xf32>
    %21 = vector.broadcast %19 : vector<1x128xf32> to vector<8x128xf32>
    %22 = arith.mulf %21, %20 : vector<8x128xf32>
    %23 = arith.addf %18, %22 : vector<8x128xf32>
    %24 = vector.extract_strided_slice %4 {offsets = [0, 1], sizes = [10, 128], strides = [1, 1]} : vector<10x130xf32> to vector<10x128xf32>
    %25 = vector.extract_strided_slice %6 {offsets = [1, 0], sizes = [1, 128], strides = [1, 1]} : vector<9x128xf32> to vector<1x128xf32>
    %26 = vector.extract_strided_slice %24 {offsets = [0, 0], sizes = [8, 128], strides = [1, 1]} : vector<10x128xf32> to vector<8x128xf32>
    %27 = vector.broadcast %25 : vector<1x128xf32> to vector<8x128xf32>
    %28 = arith.mulf %27, %26 : vector<8x128xf32>
    %29 = arith.addf %23, %28 : vector<8x128xf32>
    %30 = vector.extract_strided_slice %6 {offsets = [4, 0], sizes = [1, 128], strides = [1, 1]} : vector<9x128xf32> to vector<1x128xf32>
    %31 = vector.extract_strided_slice %24 {offsets = [1, 0], sizes = [8, 128], strides = [1, 1]} : vector<10x128xf32> to vector<8x128xf32>
    %32 = vector.broadcast %30 : vector<1x128xf32> to vector<8x128xf32>
    %33 = arith.mulf %32, %31 : vector<8x128xf32>
    %34 = arith.addf %29, %33 : vector<8x128xf32>
    %35 = vector.extract_strided_slice %6 {offsets = [7, 0], sizes = [1, 128], strides = [1, 1]} : vector<9x128xf32> to vector<1x128xf32>
    %36 = vector.extract_strided_slice %24 {offsets = [2, 0], sizes = [8, 128], strides = [1, 1]} : vector<10x128xf32> to vector<8x128xf32>
    %37 = vector.broadcast %35 : vector<1x128xf32> to vector<8x128xf32>
    %38 = arith.mulf %37, %36 : vector<8x128xf32>
    %39 = arith.addf %34, %38 : vector<8x128xf32>
    %40 = vector.extract_strided_slice %4 {offsets = [0, 2], sizes = [10, 128], strides = [1, 1]} : vector<10x130xf32> to vector<10x128xf32>
    %41 = vector.extract_strided_slice %6 {offsets = [2, 0], sizes = [1, 128], strides = [1, 1]} : vector<9x128xf32> to vector<1x128xf32>
    %42 = vector.extract_strided_slice %40 {offsets = [0, 0], sizes = [8, 128], strides = [1, 1]} : vector<10x128xf32> to vector<8x128xf32>
    %43 = vector.broadcast %41 : vector<1x128xf32> to vector<8x128xf32>
    %44 = arith.mulf %43, %42 : vector<8x128xf32>
    %45 = arith.addf %39, %44 : vector<8x128xf32>
    %46 = vector.extract_strided_slice %6 {offsets = [5, 0], sizes = [1, 128], strides = [1, 1]} : vector<9x128xf32> to vector<1x128xf32>
    %47 = vector.extract_strided_slice %40 {offsets = [1, 0], sizes = [8, 128], strides = [1, 1]} : vector<10x128xf32> to vector<8x128xf32>
    %48 = vector.broadcast %46 : vector<1x128xf32> to vector<8x128xf32>
    %49 = arith.mulf %48, %47 : vector<8x128xf32>
    %50 = arith.addf %45, %49 : vector<8x128xf32>
    %51 = vector.extract_strided_slice %6 {offsets = [8, 0], sizes = [1, 128], strides = [1, 1]} : vector<9x128xf32> to vector<1x128xf32>
    %52 = vector.extract_strided_slice %40 {offsets = [2, 0], sizes = [8, 128], strides = [1, 1]} : vector<10x128xf32> to vector<8x128xf32>
    %53 = vector.broadcast %51 : vector<1x128xf32> to vector<8x128xf32>
    %54 = arith.mulf %53, %52 : vector<8x128xf32>
    %55 = arith.addf %50, %54 : vector<8x128xf32>
    %c1 = arith.constant 1 : index
    %56 = arith.index_cast %1 : i32 to index
    %c0_4 = arith.constant 0 : index
    %57 = vector.load %arg1[%c1, %56, %c0_4] : memref<2x18x130xf32, #tpu.memory_space<vmem>>, vector<1x10x130xf32>
    %58 = vector.shape_cast %57 : vector<1x10x130xf32> to vector<10x130xf32>
    %c1_5 = arith.constant 1 : index
    %c0_6 = arith.constant 0 : index
    %c0_7 = arith.constant 0 : index
    %59 = vector.load %arg2[%c1_5, %c0_6, %c0_7] : memref<2x9x128xf32, #tpu.memory_space<vmem>>, vector<1x9x128xf32>
    %60 = vector.shape_cast %59 : vector<1x9x128xf32> to vector<9x128xf32>
    %cst_8 = arith.constant 0.000000e+00 : f32
    %61 = vector.broadcast %cst_8 : f32 to vector<8x128xf32>
    %62 = vector.extract_strided_slice %58 {offsets = [0, 0], sizes = [10, 128], strides = [1, 1]} : vector<10x130xf32> to vector<10x128xf32>
    %63 = vector.extract_strided_slice %60 {offsets = [0, 0], sizes = [1, 128], strides = [1, 1]} : vector<9x128xf32> to vector<1x128xf32>
    %64 = vector.extract_strided_slice %62 {offsets = [0, 0], sizes = [8, 128], strides = [1, 1]} : vector<10x128xf32> to vector<8x128xf32>
    %65 = vector.broadcast %63 : vector<1x128xf32> to vector<8x128xf32>
    %66 = arith.mulf %65, %64 : vector<8x128xf32>
    %67 = arith.addf %61, %66 : vector<8x128xf32>
    %68 = vector.extract_strided_slice %60 {offsets = [3, 0], sizes = [1, 128], strides = [1, 1]} : vector<9x128xf32> to vector<1x128xf32>
    %69 = vector.extract_strided_slice %62 {offsets = [1, 0], sizes = [8, 128], strides = [1, 1]} : vector<10x128xf32> to vector<8x128xf32>
    %70 = vector.broadcast %68 : vector<1x128xf32> to vector<8x128xf32>
    %71 = arith.mulf %70, %69 : vector<8x128xf32>
    %72 = arith.addf %67, %71 : vector<8x128xf32>
    %73 = vector.extract_strided_slice %60 {offsets = [6, 0], sizes = [1, 128], strides = [1, 1]} : vector<9x128xf32> to vector<1x128xf32>
    %74 = vector.extract_strided_slice %62 {offsets = [2, 0], sizes = [8, 128], strides = [1, 1]} : vector<10x128xf32> to vector<8x128xf32>
    %75 = vector.broadcast %73 : vector<1x128xf32> to vector<8x128xf32>
    %76 = arith.mulf %75, %74 : vector<8x128xf32>
    %77 = arith.addf %72, %76 : vector<8x128xf32>
    %78 = vector.extract_strided_slice %58 {offsets = [0, 1], sizes = [10, 128], strides = [1, 1]} : vector<10x130xf32> to vector<10x128xf32>
    %79 = vector.extract_strided_slice %60 {offsets = [1, 0], sizes = [1, 128], strides = [1, 1]} : vector<9x128xf32> to vector<1x128xf32>
    %80 = vector.extract_strided_slice %78 {offsets = [0, 0], sizes = [8, 128], strides = [1, 1]} : vector<10x128xf32> to vector<8x128xf32>
    %81 = vector.broadcast %79 : vector<1x128xf32> to vector<8x128xf32>
    %82 = arith.mulf %81, %80 : vector<8x128xf32>
    %83 = arith.addf %77, %82 : vector<8x128xf32>
    %84 = vector.extract_strided_slice %60 {offsets = [4, 0], sizes = [1, 128], strides = [1, 1]} : vector<9x128xf32> to vector<1x128xf32>
    %85 = vector.extract_strided_slice %78 {offsets = [1, 0], sizes = [8, 128], strides = [1, 1]} : vector<10x128xf32> to vector<8x128xf32>
    %86 = vector.broadcast %84 : vector<1x128xf32> to vector<8x128xf32>
    %87 = arith.mulf %86, %85 : vector<8x128xf32>
    %88 = arith.addf %83, %87 : vector<8x128xf32>
    %89 = vector.extract_strided_slice %60 {offsets = [7, 0], sizes = [1, 128], strides = [1, 1]} : vector<9x128xf32> to vector<1x128xf32>
    %90 = vector.extract_strided_slice %78 {offsets = [2, 0], sizes = [8, 128], strides = [1, 1]} : vector<10x128xf32> to vector<8x128xf32>
    %91 = vector.broadcast %89 : vector<1x128xf32> to vector<8x128xf32>
    %92 = arith.mulf %91, %90 : vector<8x128xf32>
    %93 = arith.addf %88, %92 : vector<8x128xf32>
    %94 = vector.extract_strided_slice %58 {offsets = [0, 2], sizes = [10, 128], strides = [1, 1]} : vector<10x130xf32> to vector<10x128xf32>
    %95 = vector.extract_strided_slice %60 {offsets = [2, 0], sizes = [1, 128], strides = [1, 1]} : vector<9x128xf32> to vector<1x128xf32>
    %96 = vector.extract_strided_slice %94 {offsets = [0, 0], sizes = [8, 128], strides = [1, 1]} : vector<10x128xf32> to vector<8x128xf32>
    %97 = vector.broadcast %95 : vector<1x128xf32> to vector<8x128xf32>
    %98 = arith.mulf %97, %96 : vector<8x128xf32>
    %99 = arith.addf %93, %98 : vector<8x128xf32>
    %100 = vector.extract_strided_slice %60 {offsets = [5, 0], sizes = [1, 128], strides = [1, 1]} : vector<9x128xf32> to vector<1x128xf32>
    %101 = vector.extract_strided_slice %94 {offsets = [1, 0], sizes = [8, 128], strides = [1, 1]} : vector<10x128xf32> to vector<8x128xf32>
    %102 = vector.broadcast %100 : vector<1x128xf32> to vector<8x128xf32>
    %103 = arith.mulf %102, %101 : vector<8x128xf32>
    %104 = arith.addf %99, %103 : vector<8x128xf32>
    %105 = vector.extract_strided_slice %60 {offsets = [8, 0], sizes = [1, 128], strides = [1, 1]} : vector<9x128xf32> to vector<1x128xf32>
    %106 = vector.extract_strided_slice %94 {offsets = [2, 0], sizes = [8, 128], strides = [1, 1]} : vector<10x128xf32> to vector<8x128xf32>
    %107 = vector.broadcast %105 : vector<1x128xf32> to vector<8x128xf32>
    %108 = arith.mulf %107, %106 : vector<8x128xf32>
    %109 = arith.addf %104, %108 : vector<8x128xf32>
    %110 = arith.addf %55, %109 : vector<8x128xf32>
    %c0_9 = arith.constant 0 : index
    %c0_10 = arith.constant 0 : index
    %111 = vector.load %arg3[%c0_9, %c0_10] : memref<1x128xf32, #tpu.memory_space<vmem>>, vector<1x128xf32>
    %112 = vector.broadcast %111 : vector<1x128xf32> to vector<8x128xf32>
    %113 = arith.addf %110, %112 : vector<8x128xf32>
    %cst_11 = arith.constant 5.000000e-01 : f32
    %114 = vector.broadcast %cst_11 : f32 to vector<8x128xf32>
    %115 = arith.mulf %113, %114 : vector<8x128xf32>
    %cst_12 = arith.constant 0.707106769 : f32
    %116 = vector.broadcast %cst_12 : f32 to vector<8x128xf32>
    %117 = arith.mulf %113, %116 : vector<8x128xf32>
    %118 = math.erf %117 : vector<8x128xf32>
    %cst_13 = arith.constant 1.000000e+00 : f32
    %119 = vector.broadcast %cst_13 : f32 to vector<8x128xf32>
    %120 = arith.addf %119, %118 : vector<8x128xf32>
    %121 = arith.mulf %115, %120 : vector<8x128xf32>
    %c0_14 = arith.constant 0 : index
    %c0_15 = arith.constant 0 : index
    %122 = vector.load %arg4[%c0_14, %c0_15] : memref<8x128xf32, #tpu.memory_space<vmem>>, vector<8x128xf32>
    tpu.vector_store %arg4[%c0_14, %c0_15], %121 {strides = array<i32>} : memref<8x128xf32, #tpu.memory_space<vmem>>, vector<8x128xf32>,
    return
  }
  func.func @transform_0(%arg0: i32) -> (i32, i32, i32) {
    %c0_i32 = arith.constant 0 : i32
    %c0_i32_0 = arith.constant 0 : i32
    %c0_i32_1 = arith.constant 0 : i32
    %c0_i32_2 = arith.constant 0 : i32
    return %c0_i32, %c0_i32_0, %c0_i32_1 : i32, i32, i32
  }
  func.func @transform_1(%arg0: i32) -> (i32, i32, i32) {
    %c0_i32 = arith.constant 0 : i32
    %c0_i32_0 = arith.constant 0 : i32
    %c0_i32_1 = arith.constant 0 : i32
    %c0_i32_2 = arith.constant 0 : i32
    return %c0_i32, %c0_i32_0, %c0_i32_1 : i32, i32, i32
  }
  func.func @transform_2(%arg0: i32) -> (i32, i32) {
    %c0_i32 = arith.constant 0 : i32
    %c0_i32_0 = arith.constant 0 : i32
    %c0_i32_1 = arith.constant 0 : i32
    return %c0_i32, %c0_i32_0 : i32, i32
  }
  func.func @transform_3(%arg0: i32) -> (i32, i32) {
    %c0_i32 = arith.constant 0 : i32
    %c0_i32_0 = arith.constant 0 : i32
    return %arg0, %c0_i32 : i32, i32
  }
}

</mosaic_0001>

<llo_original>
// kernel: tpu_custom_call.1
$region0: #{tpu_custom_call.1}
  #allocation0 [shape = 'u32[]', space=smem, size = 0x4, offset = 0x4, fixed_abs, tag = 'smem constant byte address 0x4 - core index']
  #allocation1 [shape = 'u32[144,128]{1,0:T(1,128)}', space=vmem, size = 0x12000, scoped, tag = 'internal scratch']
  %s0 = inlined_call_operand.vmem [shape: f32[2,18,130], index: 0, kind: input, shape index: {}]
  %s1 = inlined_call_operand.vmem [shape: f32[2,9,128], index: 1, kind: input, shape index: {}]
  %s2 = inlined_call_operand.vmem [shape: f32[1,128], index: 2, kind: input, shape index: {}]
  %s3 = inlined_call_operand.hbm [shape: f32[16,128], index: 3, kind: output, shape index: {}]
  %s4 = sld [smem:[#allocation0]]
  $region45: #{tpu_custom_call.1} parent=0
    _
  %s6 = ssub.s32 1, %s4
  %s7 = scalar_select 0, %s6, %s4
  $region1: #{tpu_custom_call.1} parent=0
    #allocation2 [shape = 'u8[8192]{0}', space=vmem, size = 0x2000, scoped, tag = 'output window, operand 0']
    #allocation3 [shape = 's32[2]{0}', space=sflag, size = 0x8, scoped, tag = 'scoped memory for tpu_custom_call.1']
    %8 = vsyncpa [#allocation3], 0
    %s9 = scalar_lea.sflag [#allocation3], 1
    %10 = vsyncpa %s9, 0
    loop: start=0, step=1, limit=4
    $region2: #{tpu_custom_call.1} parent=1 // loop_pre_header
      _
    $region3: #{tpu_custom_call.1} parent=1 // loop_header
      %s12 = sphi 0, %s16
      %p13 = scmp.ge.s32.totalorder %s12, 4
      %s20 = sphi 0, %s20
      %s22 = sphi 0, %s20
      %s23 = sphi 0, %s22
      %s37 = sphi 0, %s23
      %s41 = sphi 0, %s41
      %s43 = sphi 0, %s41
      %s44 = sphi 0, %s43
      %s58 = sphi 0, %s44
      %s62 = sphi 0, %s62
      %s64 = sphi 0, %s62
      %s65 = sphi 0, %s64
      %s79 = sphi 0, %s65
      %s85 = sphi 0, %s87
      %s88 = sphi 0, %s85
      %s89 = sphi 0, %s88
      %s105 = sphi 0, %s89
    $region4: #{tpu_custom_call.1} parent=1 // loop_header_branch
      %15 = sbr.rel (%p13) target = $region8
    $region5: #{tpu_custom_call.1} parent=1 // loop_body
      %s17 = ssub.s32 %s12, 1
      %s18 = ssub.s32 %s12, 2
      %s19 = sadd.s32 %s12, 1
      %s21 = sadd.s32 %s20, 1
      %p24 = scmp.eq.s32.totalorder %s12, 1
      %p25 = scmp.ne.s32.totalorder %s20, %s22
      %p26 = scmp.eq.s32.totalorder %s12, 0
      %p27 = por %p25, %p26
      %p28 = scmp.ne.s32.totalorder %s20, %s22
      %p29 = scmp.eq.s32.totalorder %s17, 1
      %p30 = por %p28, %p29
      %p31 = scmp.ne.s32.totalorder %s22, %s23
      %p32 = scmp.eq.s32.totalorder %s17, 0
      %p33 = por %p31, %p32
      %p34 = scmp.ne.s32.totalorder %s22, %s23
      %p35 = scmp.eq.s32.totalorder %s18, 1
      %p36 = por %p34, %p35
      %p38 = scmp.ne.s32.totalorder %s23, %s37
      %p39 = scmp.eq.s32.totalorder %s18, 0
      %p40 = por %p38, %p39
      %s42 = sadd.s32 %s41, 1
      %p45 = scmp.eq.s32.totalorder %s12, 1
      %p46 = scmp.ne.s32.totalorder %s41, %s43
      %p47 = scmp.eq.s32.totalorder %s12, 0
      %p48 = por %p46, %p47
      %p49 = scmp.ne.s32.totalorder %s41, %s43
      %p50 = scmp.eq.s32.totalorder %s17, 1
      %p51 = por %p49, %p50
      %p52 = scmp.ne.s32.totalorder %s43, %s44
      %p53 = scmp.eq.s32.totalorder %s17, 0
      %p54 = por %p52, %p53
      %p55 = scmp.ne.s32.totalorder %s43, %s44
      %p56 = scmp.eq.s32.totalorder %s18, 1
      %p57 = por %p55, %p56
      %p59 = scmp.ne.s32.totalorder %s44, %s58
      %p60 = scmp.eq.s32.totalorder %s18, 0
      %p61 = por %p59, %p60
      %s63 = sadd.s32 %s62, 1
      %p66 = scmp.eq.s32.totalorder %s12, 1
      %p67 = scmp.ne.s32.totalorder %s62, %s64
      %p68 = scmp.eq.s32.totalorder %s12, 0
      %p69 = por %p67, %p68
      %p70 = scmp.ne.s32.totalorder %s62, %s64
      %p71 = scmp.eq.s32.totalorder %s17, 1
      %p72 = por %p70, %p71
      %p73 = scmp.ne.s32.totalorder %s64, %s65
      %p74 = scmp.eq.s32.totalorder %s17, 0
      %p75 = por %p73, %p74
      %p76 = scmp.ne.s32.totalorder %s64, %s65
      %p77 = scmp.eq.s32.totalorder %s18, 1
      %p78 = por %p76, %p77
      %p80 = scmp.ne.s32.totalorder %s65, %s79
      %p81 = scmp.eq.s32.totalorder %s18, 0
      %p82 = por %p80, %p81
      %s83 = ssub.s32 %s12, %s19
      %p84 = scmp.eq.s32.totalorder %s83, 0
      %s86 = sadd.s32 %s85, 1
      %s87 = scalar_select %p84, %s85, %s86
      %p90 = pneg %p84
      %p91 = scmp.eq.s32.totalorder %s12, 1
      %p92 = por %p90, %p91
      %p93 = scmp.ne.s32.totalorder %s85, %s88
      %p94 = scmp.eq.s32.totalorder %s12, 0
      %p95 = por %p93, %p94
      %p96 = scmp.ne.s32.totalorder %s85, %s88
      %p97 = scmp.eq.s32.totalorder %s17, 1
      %p98 = por %p96, %p97
      %p99 = scmp.ne.s32.totalorder %s88, %s89
      %p100 = scmp.eq.s32.totalorder %s17, 0
      %p101 = por %p99, %p100
      %p102 = scmp.ne.s32.totalorder %s88, %s89
      %p103 = scmp.eq.s32.totalorder %s18, 1
      %p104 = por %p102, %p103
      %p106 = scmp.ne.s32.totalorder %s89, %s105
      %p107 = scmp.eq.s32.totalorder %s18, 0
      %p108 = por %p106, %p107
      %p109 = scmp.le.s32.totalorder 1, %s12
      %p110 = scmp.lt.s32.totalorder %s12, 3
      %p111 = pnand %p109, %p110
      %p112 = pneg %p111
      // Predicated region
      $region9: #{tpu_custom_call.1} parent=5 // pred_check
        _
      $region10: #{tpu_custom_call.1} parent=5 // pred_check_branch
        %114 = sbr.rel (%p111) target = $region12
      $region11: #{tpu_custom_call.1} parent=5 // pred_region
        %s115 = ssub.s32 %s12, 1
        // Predicated region
        $region13: #{tpu_custom_call.1} parent=11 // pred_check
          %p116 = pneg %p33
        $region14: #{tpu_custom_call.1} parent=11 // pred_check_branch
          %118 = sbr.rel (%p116) target = $region16
        $region15: #{tpu_custom_call.1} parent=11 // pred_region
          _
        $region16: #{tpu_custom_call.1} parent=11 // pred_fallthru
          _
        // Predicated region
        $region17: #{tpu_custom_call.1} parent=11 // pred_check
          %p119 = pneg %p54
        $region18: #{tpu_custom_call.1} parent=11 // pred_check_branch
          %121 = sbr.rel (%p119) target = $region20
        $region19: #{tpu_custom_call.1} parent=11 // pred_region
          _
        $region20: #{tpu_custom_call.1} parent=11 // pred_fallthru
          _
        // Predicated region
        $region21: #{tpu_custom_call.1} parent=11 // pred_check
          %p122 = pneg %p75
        $region22: #{tpu_custom_call.1} parent=11 // pred_check_branch
          %124 = sbr.rel (%p122) target = $region24
        $region23: #{tpu_custom_call.1} parent=11 // pred_region
          _
        $region24: #{tpu_custom_call.1} parent=11 // pred_fallthru
          _
      $region12: #{tpu_custom_call.1} parent=5 // pred_fallthru
        _
      %p125 = scmp.lt.s32.totalorder %s12, 2
      // Predicated region
      $region25: #{tpu_custom_call.1} parent=5 // pred_check
        %p126 = pneg %p125
      $region26: #{tpu_custom_call.1} parent=5 // pred_check_branch
        %128 = sbr.rel (%p126) target = $region28
      $region27: #{tpu_custom_call.1} parent=5 // pred_region
        _
      $region28: #{tpu_custom_call.1} parent=5 // pred_fallthru
        _
      %p129 = scmp.le.s32.totalorder 1, %s12
      %p130 = scmp.lt.s32.totalorder %s12, 3
      %p131 = pnand %p129, %p130
      %p132 = pneg %p131
      // Predicated region
      $region29: #{tpu_custom_call.1} parent=5 // pred_check
        _
      $region30: #{tpu_custom_call.1} parent=5 // pred_check_branch
        %134 = sbr.rel (%p131) target = $region32
      $region31: #{tpu_custom_call.1} parent=5 // pred_region
        %s135 = ssub.s32 %s12, 1
        %p136 = pneg %p33
        %p137 = pneg %p30
        %p138 = pneg %p54
        %p139 = pneg %p51
        %p140 = pneg %p75
        %p141 = pneg %p72
        %p142 = pneg %p101
        %p143 = pneg %p98
        %s144 = sand.u32 %s88, 1
        %s145 = scalar_lea.sflag [#allocation3], %s144
        %s146 = sand.u32 %s88, 1
        %s147 = smul.addr %s146, 8
        %s148 = scalar_lea.vmem [#allocation2], %s147
        %s149 = smul.u32 %s17, 8
        %s150 = sshra.s32 %s149, 3
        %s151 = sand.u32 %s149, 7
        %s152 = smul.u32 %s150, 2
        %s153 = smul.addr %s152, 8
        %s154 = scalar_lea.vmem %s0, %s153
        %v155 = vld [vmem:[%s154] sm:$0xff]
        %v156 = vld [vmem:[%s154 + $0x8] sm:$0xff]
        %v157 = vld [vmem:[%s154 + $0x10] sm:$0x3]
        %v158 = vld [vmem:[%s154 + $0x18] sm:$0x3]
        %v159 = vld [vmem:[%s1] sm:$0xff]
        %v160 = vld [vmem:[%s1 + $0x8] sm:$0x1]
        %v161 = vlaneseq
        %v162 = vshrl.u32 %v161, 7
        %v163 = vsub.s32 0, %v162
        %v164 = vrot.slane %v159, %v163
        %v165 = vmul.f32 %v164, %v155
        %v166 = vadd.f32 %v165, 0.0
        %v167 = vlaneseq
        %v168 = vshrl.u32 %v167, 7
        %v169 = vsub.s32 3, %v168
        %v170 = vrot.slane %v159, %v169
        %v171 = vmul.f32 %v170, %v155
        %v172 = vmul.f32 %v170, %v157
        %vm175 = vcmask 1046528
        %v176 = vrot.slane %v171, 1
        %v177 = vrot.slane %v172, 1
        %v178 = vsel %vm175, %v176, %v177
        %v180 = vadd.f32 %v166, %v178
        %v181 = vlaneseq
        %v182 = vshrl.u32 %v181, 7
        %v183 = vsub.s32 6, %v182
        %v184 = vrot.slane %v159, %v183
        %v185 = vmul.f32 %v184, %v155
        %v186 = vmul.f32 %v184, %v157
        %vm189 = vcmask 1045504
        %v190 = vrot.slane %v185, 2
        %v191 = vrot.slane %v186, 2
        %v192 = vsel %vm189, %v190, %v191
        %v194 = vadd.f32 %v180, %v192
        %v195 = vlaneseq
        %v196 = vshrl.u32 %v195, 7
        %v197 = vsub.s32 1, %v196
        %v198 = vrot.slane %v159, %v197
        %201 = vrot.lane.b32.xlu0 %v155, 127
        %v202 = vpop.permute.xlu0 %201
        %203 = vrot.lane.b32.xlu0 %v156, 127
        %v204 = vpop.permute.xlu0 %203
        %vm205 = vcmask 1039360
        %v206 = vsel %vm205, %v202, %v204
        %v208 = vmul.f32 %v198, %v206
        %v209 = vadd.f32 %v194, %v208
        %v210 = vlaneseq
        %v211 = vshrl.u32 %v210, 7
        %v212 = vsub.s32 4, %v211
        %v213 = vrot.slane %v159, %v212
        %v216 = vrot.slane %v155, 1
        %v217 = vrot.slane %v157, 1
        %v218 = vsel %vm175, %v216, %v217
        %v219 = vrot.slane %v156, 1
        %v220 = vrot.slane %v158, 1
        %v221 = vsel %vm175, %v219, %v220
        %222 = vrot.lane.b32.xlu0 %v218, 127
        %v223 = vpop.permute.xlu0 %222
        %224 = vrot.lane.b32.xlu0 %v221, 127
        %v225 = vpop.permute.xlu0 %224
        %v226 = vsel %vm205, %v223, %v225
        %v228 = vmul.f32 %v213, %v226
        %v229 = vadd.f32 %v209, %v228
        %v230 = vlaneseq
        %v231 = vshrl.u32 %v230, 7
        %v232 = vsub.s32 7, %v231
        %v233 = vrot.slane %v159, %v232
        %v234 = vrot.slane %v155, 2
        %v235 = vrot.slane %v157, 2
        %v236 = vsel %vm189, %v234, %v235
        %v237 = vrot.slane %v156, 2
        %v238 = vrot.slane %v158, 2
        %v239 = vsel %vm189, %v237, %v238
        %240 = vrot.lane.b32.xlu0 %v236, 127
        %v241 = vpop.permute.xlu0 %240
        %242 = vrot.lane.b32.xlu0 %v239, 127
        %v243 = vpop.permute.xlu0 %242
        %v244 = vsel %vm205, %v241, %v243
        %v246 = vmul.f32 %v233, %v244
        %v247 = vadd.f32 %v229, %v246
        %v248 = vlaneseq
        %v249 = vshrl.u32 %v248, 7
        %v250 = vsub.s32 2, %v249
        %v251 = vrot.slane %v159, %v250
        %252 = vrot.lane.b32.xlu0 %v155, 126
        %v253 = vpop.permute.xlu0 %252
        %254 = vrot.lane.b32.xlu0 %v156, 126
        %v255 = vpop.permute.xlu0 %254
        %vm256 = vcmask 1031168
        %v257 = vsel %vm256, %v253, %v255
        %v259 = vmul.f32 %v251, %v257
        %v260 = vadd.f32 %v247, %v259
        %v261 = vlaneseq
        %v262 = vshrl.u32 %v261, 7
        %v263 = vsub.s32 5, %v262
        %v264 = vrot.slane %v159, %v263
        %265 = vrot.lane.b32.xlu0 %v218, 126
        %v266 = vpop.permute.xlu0 %265
        %267 = vrot.lane.b32.xlu0 %v221, 126
        %v268 = vpop.permute.xlu0 %267
        %v269 = vsel %vm256, %v266, %v268
        %v271 = vmul.f32 %v264, %v269
        %v272 = vadd.f32 %v260, %v271
        %v273 = vlaneseq
        %v274 = vshrl.u32 %v273, 7
        %v275 = vsub.s32 0, %v274
        %v276 = vrot.slane %v160, %v275
        %277 = vrot.lane.b32.xlu0 %v236, 126
        %v278 = vpop.permute.xlu0 %277
        %279 = vrot.lane.b32.xlu0 %v239, 126
        %v280 = vpop.permute.xlu0 %279
        %v281 = vsel %vm256, %v278, %v280
        %v283 = vmul.f32 %v276, %v281
        %v284 = vadd.f32 %v272, %v283
        %s285 = sadd.s32 %s152, 6
        %s286 = smul.addr %s285, 8
        %s287 = scalar_lea.vmem %s0, %s286
        %v288 = vld [vmem:[%s287] sm:$0xff]
        %v289 = vld [vmem:[%s287 + $0x8] sm:$0xff]
        %v290 = vld [vmem:[%s287 + $0x10] sm:$0x3]
        %v291 = vld [vmem:[%s287 + $0x18] sm:$0x3]
        %s292 = scalar_lea.vmem %s1, 16
        %v293 = vld [vmem:[%s292] sm:$0xff]
        %v294 = vld [vmem:[%s292 + $0x8] sm:$0x1]
        %v295 = vlaneseq
        %v296 = vshrl.u32 %v295, 7
        %v297 = vsub.s32 0, %v296
        %v298 = vrot.slane %v293, %v297
        %v299 = vmul.f32 %v298, %v288
        %v300 = vadd.f32 %v299, 0.0
        %v301 = vlaneseq
        %v302 = vshrl.u32 %v301, 7
        %v303 = vsub.s32 3, %v302
        %v304 = vrot.slane %v293, %v303
        %v305 = vmul.f32 %v304, %v288
        %v306 = vmul.f32 %v304, %v290
        %v309 = vrot.slane %v305, 1
        %v310 = vrot.slane %v306, 1
        %v311 = vsel %vm175, %v309, %v310
        %v313 = vadd.f32 %v300, %v311
        %v314 = vlaneseq
        %v315 = vshrl.u32 %v314, 7
        %v316 = vsub.s32 6, %v315
        %v317 = vrot.slane %v293, %v316
        %v318 = vmul.f32 %v317, %v288
        %v319 = vmul.f32 %v317, %v290
        %v322 = vrot.slane %v318, 2
        %v323 = vrot.slane %v319, 2
        %v324 = vsel %vm189, %v322, %v323
        %v326 = vadd.f32 %v313, %v324
        %v327 = vlaneseq
        %v328 = vshrl.u32 %v327, 7
        %v329 = vsub.s32 1, %v328
        %v330 = vrot.slane %v293, %v329
        %333 = vrot.lane.b32.xlu0 %v288, 127
        %v334 = vpop.permute.xlu0 %333
        %335 = vrot.lane.b32.xlu0 %v289, 127
        %v336 = vpop.permute.xlu0 %335
        %v337 = vsel %vm205, %v334, %v336
        %v339 = vmul.f32 %v330, %v337
        %v340 = vadd.f32 %v326, %v339
        %v341 = vlaneseq
        %v342 = vshrl.u32 %v341, 7
        %v343 = vsub.s32 4, %v342
        %v344 = vrot.slane %v293, %v343
        %v347 = vrot.slane %v288, 1
        %v348 = vrot.slane %v290, 1
        %v349 = vsel %vm175, %v347, %v348
        %v350 = vrot.slane %v289, 1
        %v351 = vrot.slane %v291, 1
        %v352 = vsel %vm175, %v350, %v351
        %353 = vrot.lane.b32.xlu0 %v349, 127
        %v354 = vpop.permute.xlu0 %353
        %355 = vrot.lane.b32.xlu0 %v352, 127
        %v356 = vpop.permute.xlu0 %355
        %v357 = vsel %vm205, %v354, %v356
        %v359 = vmul.f32 %v344, %v357
        %v360 = vadd.f32 %v340, %v359
        %v361 = vlaneseq
        %v362 = vshrl.u32 %v361, 7
        %v363 = vsub.s32 7, %v362
        %v364 = vrot.slane %v293, %v363
        %v365 = vrot.slane %v288, 2
        %v366 = vrot.slane %v290, 2
        %v367 = vsel %vm189, %v365, %v366
        %v368 = vrot.slane %v289, 2
        %v369 = vrot.slane %v291, 2
        %v370 = vsel %vm189, %v368, %v369
        %371 = vrot.lane.b32.xlu0 %v367, 127
        %v372 = vpop.permute.xlu0 %371
        %373 = vrot.lane.b32.xlu0 %v370, 127
        %v374 = vpop.permute.xlu0 %373
        %v375 = vsel %vm205, %v372, %v374
        %v377 = vmul.f32 %v364, %v375
        %v378 = vadd.f32 %v360, %v377
        %v379 = vlaneseq
        %v380 = vshrl.u32 %v379, 7
        %v381 = vsub.s32 2, %v380
        %v382 = vrot.slane %v293, %v381
        %383 = vrot.lane.b32.xlu0 %v288, 126
        %v384 = vpop.permute.xlu0 %383
        %385 = vrot.lane.b32.xlu0 %v289, 126
        %v386 = vpop.permute.xlu0 %385
        %v387 = vsel %vm256, %v384, %v386
        %v389 = vmul.f32 %v382, %v387
        %v390 = vadd.f32 %v378, %v389
        %v391 = vlaneseq
        %v392 = vshrl.u32 %v391, 7
        %v393 = vsub.s32 5, %v392
        %v394 = vrot.slane %v293, %v393
        %395 = vrot.lane.b32.xlu0 %v349, 126
        %v396 = vpop.permute.xlu0 %395
        %397 = vrot.lane.b32.xlu0 %v352, 126
        %v398 = vpop.permute.xlu0 %397
        %v399 = vsel %vm256, %v396, %v398
        %v401 = vmul.f32 %v394, %v399
        %v402 = vadd.f32 %v390, %v401
        %v403 = vlaneseq
        %v404 = vshrl.u32 %v403, 7
        %v405 = vsub.s32 0, %v404
        %v406 = vrot.slane %v294, %v405
        %407 = vrot.lane.b32.xlu0 %v367, 126
        %v408 = vpop.permute.xlu0 %407
        %409 = vrot.lane.b32.xlu0 %v370, 126
        %v410 = vpop.permute.xlu0 %409
        %v411 = vsel %vm256, %v408, %v410
        %v413 = vmul.f32 %v406, %v411
        %v414 = vadd.f32 %v402, %v413
        %v415 = vadd.f32 %v284, %v414
        %v416 = vld [vmem:[%s2] sm:$0x1]
        %v418 = vlaneseq
        %v419 = vshrl.u32 %v418, 7
        %v420 = vsub.s32 0, %v419
        %v421 = vrot.slane %v416, %v420
        %v423 = vadd.f32 %v415, %v421
        %v424 = vmul.f32 %v423, 0.5
        %v425 = vmul.f32 %v423, 0.70710677
        %v426 = verf.f32.pop %v425
        %v427 = vadd.f32 %v426, 1.0
        %v428 = vmul.f32 %v424, %v427
        %429 = vst [vmem:[%s148] sm:$0xff] %v428
        %s430 = sand.u32 %s88, 1
        %s431 = scalar_lea.sflag [#allocation3], %s430
        %s432 = sand.u32 %s88, 1
        %s433 = smul.addr %s432, 8
        %s434 = scalar_lea.vmem [#allocation2], %s433
        // Predicated region
        $region33: #{tpu_custom_call.1} parent=31 // pred_check
          %p435 = pneg %p98
        $region34: #{tpu_custom_call.1} parent=31 // pred_check_branch
          %437 = sbr.rel (%p435) target = $region36
        $region35: #{tpu_custom_call.1} parent=31 // pred_region
          %s439 = ssub.s32 128, 128
          %440 = vsyncadd %s431, %s439
          %s441 = smul.addr %s17, 128
          %s442 = scalar_lea.hbm %s3, %s441
          %s444 = sshll.u32 %s434, 4
          %s445 = int_to_ptr.vmem [resolvable:$true] %s444
          %447 = dma.vmem_to_hbm [thread:$0]  %s445, 128, %s442, %s431
        $region36: #{tpu_custom_call.1} parent=31 // pred_fallthru
          _
      $region32: #{tpu_custom_call.1} parent=5 // pred_fallthru
        _
      %p448 = scmp.le.s32.totalorder 2, %s12
      // Predicated region
      $region37: #{tpu_custom_call.1} parent=5 // pred_check
        %p449 = pneg %p448
      $region38: #{tpu_custom_call.1} parent=5 // pred_check_branch
        %451 = sbr.rel (%p449) target = $region40
      $region39: #{tpu_custom_call.1} parent=5 // pred_region
        %s452 = ssub.s32 %s12, 2
        // Predicated region
        $region41: #{tpu_custom_call.1} parent=39 // pred_check
          %p453 = pneg %p104
        $region42: #{tpu_custom_call.1} parent=39 // pred_check_branch
          %455 = sbr.rel (%p453) target = $region44
        $region43: #{tpu_custom_call.1} parent=39 // pred_region
          %s456 = sand.u32 %s89, 1
          %s457 = scalar_lea.sflag [#allocation3], %s456
          %s458 = sand.u32 %s89, 1
          %s459 = smul.addr %s458, 8
          %s460 = scalar_lea.vmem [#allocation2], %s459
          %461 = dma.done %s457, 128
        $region44: #{tpu_custom_call.1} parent=39 // pred_fallthru
          _
      $region40: #{tpu_custom_call.1} parent=5 // pred_fallthru
        _
    $region6: #{tpu_custom_call.1} parent=1 // loop_footer
      %s16 = sadd.s32 1, %s12
    $region7: #{tpu_custom_call.1} parent=1 // loop_footer_branch
      %11 = sbr.rel target = $region3
    $region8: #{tpu_custom_call.1} parent=1 // loop_exit
      _
    %462 = vsyncpa [#allocation3], 1
    %s463 = scalar_lea.sflag [#allocation3], 1
    %464 = vsyncpa %s463, 1

</llo_original>
